<compile_context>
chip_gen: v7x
topology: tpu7x:2x2x1
jax: 0.10.0
libtpu: 0.0.40
codegen_flags: <defaults>
</compile_context>

<pallas_src>
import jax
import jax.numpy as jnp
from jax.experimental import pallas as pl
from jax.experimental.pallas import tpu as pltpu


# ----------------------------- helpers ------------------------------------

def _round_up(x, m):
    return (x + m - 1) // m * m


_M_TILE_MAX = 512   # rows of D per grid step (plenty for typical batch sizes)


# ----------------------------- kernel --------------------------------------

def _vdc_gram_kernel(d_ref, g_ref, out_ref):
    # d_ref  : (m_tile, K_pad) f32   coefficient-difference rows for this tile
    # g_ref  : (K_pad, K_pad) f32    resident Gram matrix of the extended basis
    # out_ref: (1, 8, K_pad)  f32    lane-dense per-tile partial sums
    d = d_ref[...]
    dg = jnp.dot(d, g_ref[...], preferred_element_type=jnp.float32)  # MXU, f32 acc
    prod = d * dg                                                    # VPU elementwise

    # Fold the sublane (M) axis down to 8 rows before writeback (cheap VPU adds,
    # static lane/sublane-aligned slices) -> tiny output HBM traffic.
    m = prod.shape[0]
    acc = prod[0:8, :]
    for r in range(1, m // 8):
        acc = acc + prod[r * 8:(r + 1) * 8, :]
    out_ref[...] = acc[None, :, :]


def _vdc_partial_sums(d, g):
    m_pad, k_pad = d.shape
    m_tile = m_pad if m_pad <= _M_TILE_MAX else _M_TILE_MAX
    num_tiles = m_pad // m_tile

    flops = 2 * m_pad * k_pad * k_pad + 2 * m_pad * k_pad
    bytes_accessed = (d.size * d.dtype.itemsize
                      + g.size * g.dtype.itemsize
                      + num_tiles * 8 * k_pad * 4)

    return pl.pallas_call(
        _vdc_gram_kernel,
        out_shape=jax.ShapeDtypeStruct((num_tiles, 8, k_pad), jnp.float32),
        grid_spec=pltpu.PrefetchScalarGridSpec(
            num_scalar_prefetch=0,
            grid=(num_tiles,),
            in_specs=[
                # D: tiled over rows (batch*3 axis).
                pl.BlockSpec((m_tile, k_pad), lambda i: (i, 0)),
                # G: tiny constant, block index never changes -> stays resident.
                pl.BlockSpec((k_pad, k_pad), lambda i: (0, 0)),
            ],
            out_specs=pl.BlockSpec((1, 8, k_pad), lambda i: (i, 0, 0)),
        ),
        compiler_params=pltpu.CompilerParams(
            dimension_semantics=("parallel",),
        ),
        cost_estimate=pl.CostEstimate(
            flops=flops, transcendentals=0, bytes_accessed=bytes_accessed),
    )(d, g)


# ----------------------------- wrapper --------------------------------------

def _prepare_gram(u, w_shp, w_exp):
    """Constant-basis Gram matrix.  Done ONCE per model, not per call."""
    L = u.shape[0]
    V = L // 3
    nb = w_shp.shape[1] + w_exp.shape[1]

    w_full = jnp.concatenate([w_shp, w_exp], axis=1).astype(jnp.float32)   # (3V, nb)
    # row c'*nb + k  ->  w_full[3v + c', k]
    w3 = w_full.reshape(V, 3, nb).transpose(1, 2, 0).reshape(3 * nb, V)
    u3 = u.reshape(V, 3).T.astype(jnp.float32)                             # (3, V)
    ones = jnp.ones((1, V), jnp.float32)                                   # offset row
    w_ext = jnp.concatenate([w3, u3, ones], axis=0)                        # (K0, V)

    k0 = 3 * nb + 4
    k_pad = _round_up(k0, 128)

    # One-time Gram at highest precision; zero padding keeps padded D columns
    # exact no-ops.
    gram = jnp.dot(w_ext, w_ext.T, precision=jax.lax.Precision.HIGHEST)    # (K0, K0)
    gram = jnp.pad(gram, ((0, k_pad - k0), (0, k_pad - k0)))
    return gram, nb, k0, k_pad, V


def _coeff_diff(inp, tgt, param_mean, param_std, nb, k0, k_pad):
    """Per-sample coefficient-difference matrix D (tiny: (M_pad, K_pad), f32)."""
    N = inp.shape[0]
    param = (inp * param_std + param_mean).astype(jnp.float32)
    param_gt = (tgt * param_std + param_mean).astype(jnp.float32)

    def parse(pp):
        p_ = pp[:, :12].reshape(N, 3, 4)
        return p_[:, :, :3], p_[:, :, 3], pp[:, 12:]       # P (N,3,3), off (N,3), alpha (N,nb)

    p, off, alpha = parse(param)
    pg, offg, alphag = parse(param_gt)
    # offset[:, -1] = offsetg[:, -1]  (replace predicted z-offset with GT)
    off = off.at[:, 2].set(offg[:, 2])

    def build(pm, offm, al):
        # coefficient of W3 row (c', k)  is  P[n, c, c'] * alpha[n, k]
        basis = (pm[:, :, :, None] * al[:, None, None, :]).reshape(N, 3, 3 * nb)
        # coefficient of u row c' is P[n, c, c'];  coefficient of ones row is off[n, c]
        return jnp.concatenate([basis, pm, offm[:, :, None]], axis=-1)     # (N, 3, K0)

    d = (build(pg, offg, alphag) - build(p, off, alpha)).reshape(3 * N, k0)

    m_pad = _round_up(3 * N, 8)
    if m_pad > _M_TILE_MAX:
        m_pad = _round_up(m_pad, _M_TILE_MAX)
    d = jnp.pad(d, ((0, m_pad - 3 * N), (0, k_pad - k0)))
    return d.astype(jnp.float32)


def make_vdc_loss_fn(u, w_shp, w_exp, param_mean, param_std):
    """Returns a jitted loss_fn(inp, tgt) reproducing VDCLoss.forward_all."""
    gram, nb, k0, k_pad, V = _prepare_gram(u, w_shp, w_exp)

    def loss_fn(inp, tgt):
        N = inp.shape[0]
        d = _coeff_diff(inp, tgt, param_mean, param_std, nb, k0, k_pad)
        partial = _vdc_partial_sums(d, gram)                # (num_tiles, 8, K_pad)
        return jnp.sum(partial) / (N * 3 * V)

    return jax.jit(loss_fn)


# TODO(synk): forward_resample (torch.randperm-based keypoint resampling) is not
# implemented; only the default opt_style='all' forward path is reproduced.


# ----------------------------- reference ------------------------------------

def vdc_loss_reference(inp, tgt, u, w_shp, w_exp, param_mean, param_std):
    """Pure-JAX mirror of the PyTorch forward_all, for verification."""
    N = inp.shape[0]
    param = inp * param_std + param_mean
    param_gt = tgt * param_std + param_mean

    def parse(pp):
        p_ = pp[:, :12].reshape(N, 3, 4)
        return (p_[:, :, :3], p_[:, :, 3:4],
                pp[:, 12:52, None], pp[:, 52:, None])

    p, off, a_shp, a_exp = parse(param)
    pg, offg, a_shpg, a_expg = parse(param_gt)
    off = off.at[:, 2].set(offg[:, 2])

    def recon(pm, offm, ash, aex):
        g = u + w_shp @ ash + w_exp @ aex                   # (N, 3V, 1)
        g = g.reshape(N, -1, 3).transpose(0, 2, 1)          # (N, 3, V)
        return pm @ g + offm

    vg = recon(pg, offg, a_shpg, a_expg)
    v = recon(p, off, a_shp, a_exp)
    return jnp.mean((vg - v) ** 2)


# ----------------------------- demo / check ---------------------------------

if __name__ == "__main__":
    N = 4            # batch
    V = 500          # vertices (arbitrary, not 128-aligned)
    L = 3 * V
    N_SHP, N_EXP = 40, 10
    PARAM_DIM = 12 + N_SHP + N_EXP   # 62

    key = jax.random.PRNGKey(0)
    k = jax.random.split(key, 7)
    u = jax.random.normal(k[0], (L, 1), jnp.float32)
    w_shp = 0.1 * jax.random.normal(k[1], (L, N_SHP), jnp.float32)
    w_exp = 0.1 * jax.random.normal(k[2], (L, N_EXP), jnp.float32)
    param_mean = 0.1 * jax.random.normal(k[3], (PARAM_DIM,), jnp.float32)
    param_std = 0.5 + jax.random.uniform(k[4], (PARAM_DIM,), jnp.float32)
    inp = jax.random.normal(k[5], (N, PARAM_DIM), jnp.float32)
    tgt = jax.random.normal(k[6], (N, PARAM_DIM), jnp.float32)

    loss_ref = jax.block_until_ready(
        vdc_loss_reference(inp, tgt, u, w_shp, w_exp, param_mean, param_std))

    loss_fn = make_vdc_loss_fn(u, w_shp, w_exp, param_mean, param_std)
    loss = jax.block_until_ready(loss_fn(inp, tgt))

    assert jnp.isfinite(loss), loss
    # Gram formulation changes summation order vs. the reference; f32 throughout.
    assert jnp.allclose(loss, loss_ref, rtol=1e-3, atol=1e-6), (loss, loss_ref)

    # Second call (steady-state, no recompilation) just to exercise the jitted path.
    loss2 = jax.block_until_ready(loss_fn(inp * 0.5, tgt * 0.5))
    assert jnp.isfinite(loss2), loss2

    print("KERNEL_OK")
</pallas_src>

<mosaic_0001>
module attributes {stable_mosaic.version = 11 : i64} {
  func.func @_vdc_gram_kernel(%arg0: i32, %arg1: memref<16x256xf32, #tpu.memory_space<vmem>>, %arg2: memref<256x256xf32, #tpu.memory_space<vmem>>, %arg3: memref<1x8x256xf32, #tpu.memory_space<vmem>>) attributes {dimension_semantics = [#tpu.dimension_semantics<parallel>], iteration_bounds = array<i64: 1>, scalar_prefetch = 0 : i64, scratch_operands = 0 : i64, tpu.core_type = #tpu.core_type<tc>, window_params = [{transform_indices = @transform_0, window_bounds = array<i64: 16, 256>}, {pipeline_mode = #tpu.pipeline_mode<synchronous>, transform_indices = @transform_1, window_bounds = array<i64: 256, 256>}, {transform_indices = @transform_2, window_bounds = array<i64: 1, 8, 256>}]} {
    %c0 = arith.constant 0 : index
    %c0_0 = arith.constant 0 : index
    %0 = vector.load %arg1[%c0, %c0_0] : memref<16x256xf32, #tpu.memory_space<vmem>>, vector<16x256xf32>
    %c0_1 = arith.constant 0 : index
    %c0_2 = arith.constant 0 : index
    %1 = vector.load %arg2[%c0_1, %c0_2] : memref<256x256xf32, #tpu.memory_space<vmem>>, vector<256x256xf32>
    %cst = arith.constant dense<0.000000e+00> : vector<16x256xf32>
    %2 = tpu.matmul %0, %1, %cst {dimension_numbers = #tpu.dot_dimension_numbers<[1], [0], [0], [1], [0, 0, 1, 1], [], []>} : vector<16x256xf32>, vector<256x256xf32>, vector<16x256xf32> -> vector<16x256xf32>
    %3 = arith.mulf %0, %2 : vector<16x256xf32>
    %4 = vector.extract_strided_slice %3 {offsets = [0, 0], sizes = [8, 256], strides = [1, 1]} : vector<16x256xf32> to vector<8x256xf32>
    %5 = vector.extract_strided_slice %3 {offsets = [8, 0], sizes = [8, 256], strides = [1, 1]} : vector<16x256xf32> to vector<8x256xf32>
    %6 = arith.addf %4, %5 : vector<8x256xf32>
    %7 = vector.shape_cast %6 : vector<8x256xf32> to vector<1x8x256xf32>
    %c0_3 = arith.constant 0 : index
    %c0_4 = arith.constant 0 : index
    %c0_5 = arith.constant 0 : index
    %8 = vector.load %arg3[%c0_3, %c0_4, %c0_5] : memref<1x8x256xf32, #tpu.memory_space<vmem>>, vector<1x8x256xf32>
    tpu.vector_store %arg3[%c0_3, %c0_4, %c0_5], %7 {strides = array<i32>} : memref<1x8x256xf32, #tpu.memory_space<vmem>>, vector<1x8x256xf32>,
    return
  }
  func.func @transform_0(%arg0: i32) -> (i32, i32) {
    %c0_i32 = arith.constant 0 : i32
    %c0_i32_0 = arith.constant 0 : i32
    return %arg0, %c0_i32 : i32, i32
  }
  func.func @transform_1(%arg0: i32) -> (i32, i32) {
    %c0_i32 = arith.constant 0 : i32
    %c0_i32_0 = arith.constant 0 : i32
    %c0_i32_1 = arith.constant 0 : i32
    return %c0_i32, %c0_i32_0 : i32, i32
  }
  func.func @transform_2(%arg0: i32) -> (i32, i32, i32) {
    %c0_i32 = arith.constant 0 : i32
    %c0_i32_0 = arith.constant 0 : i32
    %c0_i32_1 = arith.constant 0 : i32
    return %arg0, %c0_i32, %c0_i32_0 : i32, i32, i32
  }
}

</mosaic_0001>

<llo_original>
// kernel: mul.2
$region0: #{mul.2}
  #allocation0 [shape = 's32[1]{0}', space=sflag, size = 0x4, scoped, tag = 'scoped memory for mul.2']
  %s0 = inlined_call_operand.vmem [shape: f32[12,150], index: 0, kind: input, shape index: {}]
  %s1 = inlined_call_operand.vmem [shape: f32[12,150], index: 1, kind: input, shape index: {}]
  %s2 = inlined_call_operand.vmem [shape: f32[12,150], index: 2, kind: output, shape index: {}]
  %v3 = vld [vmem:[%s0] sm:$0xff]
  %v4 = vld [vmem:[%s1] sm:$0xff]
  %5 = xla_tuple %v3, %v4
  %6 = xla_tuple %5
  %v7 = vmul.f32 %v3, %v4
  %8 = xla_tuple %v7
  %9 = vst [vmem:[%s2] sm:$0xff] %v7
  %s10 = scalar_lea.vmem %s0, 16
  %v11 = vld [vmem:[%s10] sm:$0xff]
  %s12 = scalar_lea.vmem %s1, 16
  %v13 = vld [vmem:[%s12] sm:$0xff]
  %14 = xla_tuple %v11, %v13
  %15 = xla_tuple %14
  %v16 = vmul.f32 %v11, %v13
  %17 = xla_tuple %v16
  %s18 = scalar_lea.vmem %s2, 16
  %19 = vst [vmem:[%s18] sm:$0xff] %v16
  %s20 = scalar_lea.vmem %s0, 8
  %v21 = vld [vmem:[%s20] sm:$0xff]
  %s22 = scalar_lea.vmem %s1, 8
  %v23 = vld [vmem:[%s22] sm:$0xff]
  %24 = xla_tuple %v21, %v23
  %25 = xla_tuple %24
  %v26 = vmul.f32 %v21, %v23
  %27 = xla_tuple %v26
  %s28 = scalar_lea.vmem %s2, 8
  %29 = vst [vmem:[%s28] sm:$0xff] %v26
  %s30 = scalar_lea.vmem %s0, 24
  %v31 = vld [vmem:[%s30] sm:$0xff]
  %s32 = scalar_lea.vmem %s1, 24
  %v33 = vld [vmem:[%s32] sm:$0xff]
  %34 = xla_tuple %v31, %v33
  %35 = xla_tuple %34
  %v36 = vmul.f32 %v31, %v33
  %37 = xla_tuple %v36
  %s38 = scalar_lea.vmem %s2, 24
  %39 = vst [vmem:[%s38] sm:$0xff] %v36

// kernel: loss_fn.1
$region0: #{loss_fn.1}
  #allocation0 [shape = 'u32[]', space=smem, size = 0x4, offset = 0x4, fixed_abs, tag = 'smem constant byte address 0x4 - core index']
  #allocation1 [shape = 'u32[144,128]{1,0:T(1,128)}', space=vmem, size = 0x12000, scoped, tag = 'internal scratch']
  %s0 = inlined_call_operand.vmem [shape: f32[16,256], index: 0, kind: input, shape index: {}]
  %s1 = inlined_call_operand.vmem [shape: f32[256,256], index: 1, kind: input, shape index: {}]
  %s2 = inlined_call_operand.vmem [shape: f32[1,8,256], index: 2, kind: output, shape index: {}]
  %s3 = sld [smem:[#allocation0]]
  $region18: #{loss_fn.1} parent=0
    _
  %s5 = ssub.s32 1, %s3
  %s6 = scalar_select 0, %s5, %s3
  // Predicated region
  $region2: #{loss_fn.1} parent=0 // pred_check
    _
  $region3: #{loss_fn.1} parent=0 // pred_check_branch
    %8 = sbr.rel (0) target = $region5
  $region4: #{loss_fn.1} parent=0 // pred_region
    _
  $region5: #{loss_fn.1} parent=0 // pred_fallthru
    _
  // Predicated region
  $region6: #{loss_fn.1} parent=0 // pred_check
    _
  $region7: #{loss_fn.1} parent=0 // pred_check_branch
    %10 = sbr.rel (0) target = $region9
  $region8: #{loss_fn.1} parent=0 // pred_region
    _
  $region9: #{loss_fn.1} parent=0 // pred_fallthru
    _
  %v11 = vld [vmem:[%s0] sm:$0xff]
  %v12 = vld [vmem:[%s0 + $0x8] sm:$0xff]
  %v13 = vld [vmem:[%s0 + $0x10] sm:$0xff]
  %v14 = vld [vmem:[%s0 + $0x18] sm:$0xff]
  %v15 = vld [vmem:[%s1] sm:$0xff]
  %v16 = vld [vmem:[%s1 + $0x8] sm:$0xff]
  %v17 = vld [vmem:[%s1 + $0x10] sm:$0xff]
  %v18 = vld [vmem:[%s1 + $0x18] sm:$0xff]
  %v19 = vld [vmem:[%s1 + $0x20] sm:$0xff]
  %v20 = vld [vmem:[%s1 + $0x28] sm:$0xff]
  %v21 = vld [vmem:[%s1 + $0x30] sm:$0xff]
  %v22 = vld [vmem:[%s1 + $0x38] sm:$0xff]
  %v23 = vld [vmem:[%s1 + $0x40] sm:$0xff]
  %v24 = vld [vmem:[%s1 + $0x48] sm:$0xff]
  %v25 = vld [vmem:[%s1 + $0x50] sm:$0xff]
  %v26 = vld [vmem:[%s1 + $0x58] sm:$0xff]
  %v27 = vld [vmem:[%s1 + $0x60] sm:$0xff]
  %v28 = vld [vmem:[%s1 + $0x68] sm:$0xff]
  %v29 = vld [vmem:[%s1 + $0x70] sm:$0xff]
  %v30 = vld [vmem:[%s1 + $0x78] sm:$0xff]
  %v31 = vld [vmem:[%s1 + $0x80] sm:$0xff]
  %v32 = vld [vmem:[%s1 + $0x88] sm:$0xff]
  %v33 = vld [vmem:[%s1 + $0x90] sm:$0xff]
  %v34 = vld [vmem:[%s1 + $0x98] sm:$0xff]
  %v35 = vld [vmem:[%s1 + $0xa0] sm:$0xff]
  %v36 = vld [vmem:[%s1 + $0xa8] sm:$0xff]
  %v37 = vld [vmem:[%s1 + $0xb0] sm:$0xff]
  %v38 = vld [vmem:[%s1 + $0xb8] sm:$0xff]
  %v39 = vld [vmem:[%s1 + $0xc0] sm:$0xff]
  %v40 = vld [vmem:[%s1 + $0xc8] sm:$0xff]
  %v41 = vld [vmem:[%s1 + $0xd0] sm:$0xff]
  %v42 = vld [vmem:[%s1 + $0xd8] sm:$0xff]
  %v43 = vld [vmem:[%s1 + $0xe0] sm:$0xff]
  %v44 = vld [vmem:[%s1 + $0xe8] sm:$0xff]
  %v45 = vld [vmem:[%s1 + $0xf0] sm:$0xff]
  %v46 = vld [vmem:[%s1 + $0xf8] sm:$0xff]
  %v47 = vld [vmem:[%s1 + $0x100] sm:$0xff]
  %v48 = vld [vmem:[%s1 + $0x108] sm:$0xff]
  %v49 = vld [vmem:[%s1 + $0x110] sm:$0xff]
  %v50 = vld [vmem:[%s1 + $0x118] sm:$0xff]
  %v51 = vld [vmem:[%s1 + $0x120] sm:$0xff]
  %v52 = vld [vmem:[%s1 + $0x128] sm:$0xff]
  %v53 = vld [vmem:[%s1 + $0x130] sm:$0xff]
  %v54 = vld [vmem:[%s1 + $0x138] sm:$0xff]
  %v55 = vld [vmem:[%s1 + $0x140] sm:$0xff]
  %v56 = vld [vmem:[%s1 + $0x148] sm:$0xff]
  %v57 = vld [vmem:[%s1 + $0x150] sm:$0xff]
  %v58 = vld [vmem:[%s1 + $0x158] sm:$0xff]
  %v59 = vld [vmem:[%s1 + $0x160] sm:$0xff]
  %v60 = vld [vmem:[%s1 + $0x168] sm:$0xff]
  %v61 = vld [vmem:[%s1 + $0x170] sm:$0xff]
  %v62 = vld [vmem:[%s1 + $0x178] sm:$0xff]
  %v63 = vld [vmem:[%s1 + $0x180] sm:$0xff]
  %v64 = vld [vmem:[%s1 + $0x188] sm:$0xff]
  %v65 = vld [vmem:[%s1 + $0x190] sm:$0xff]
  %v66 = vld [vmem:[%s1 + $0x198] sm:$0xff]
  %v67 = vld [vmem:[%s1 + $0x1a0] sm:$0xff]
  %v68 = vld [vmem:[%s1 + $0x1a8] sm:$0xff]
  %v69 = vld [vmem:[%s1 + $0x1b0] sm:$0xff]
  %v70 = vld [vmem:[%s1 + $0x1b8] sm:$0xff]
  %v71 = vld [vmem:[%s1 + $0x1c0] sm:$0xff]
  %v72 = vld [vmem:[%s1 + $0x1c8] sm:$0xff]
  %v73 = vld [vmem:[%s1 + $0x1d0] sm:$0xff]
  %v74 = vld [vmem:[%s1 + $0x1d8] sm:$0xff]
  %v75 = vld [vmem:[%s1 + $0x1e0] sm:$0xff]
  %v76 = vld [vmem:[%s1 + $0x1e8] sm:$0xff]
  %v77 = vld [vmem:[%s1 + $0x1f0] sm:$0xff]
  %v78 = vld [vmem:[%s1 + $0x1f8] sm:$0xff]
  %79 = vmatprep.subr.mxu0 %v16
  %80 = vmatpush1.msra.mxu0 %v15
  %81 = vmatprep.subr.mxu0 %v18
  %82 = vmatpush1.msra.mxu0 %v17
  %83 = vmatprep.subr.mxu0 %v20
  %84 = vmatpush1.msra.mxu0 %v19
  %85 = vmatprep.subr.mxu0 %v22
  %86 = vmatpush1.msra.mxu0 %v21
  %87 = vmatprep.subr.mxu0 %v24
  %88 = vmatpush1.msra.mxu0 %v23
  %89 = vmatprep.subr.mxu0 %v26
  %90 = vmatpush1.msra.mxu0 %v25
  %91 = vmatprep.subr.mxu0 %v28
  %92 = vmatpush1.msra.mxu0 %v27
  %93 = vmatprep.subr.mxu0 %v30
  %94 = vmatpush1.msra.mxu0 %v29
  %95 = vmatprep.subr.mxu0 %v32
  %96 = vmatpush1.msra.mxu0 %v31
  %97 = vmatprep.subr.mxu0 %v34
  %98 = vmatpush1.msra.mxu0 %v33
  %99 = vmatprep.subr.mxu0 %v36
  %100 = vmatpush1.msra.mxu0 %v35
  %101 = vmatprep.subr.mxu0 %v38
  %102 = vmatpush1.msra.mxu0 %v37
  %103 = vmatprep.subr.mxu0 %v40
  %104 = vmatpush1.msra.mxu0 %v39
  %105 = vmatprep.subr.mxu0 %v42
  %106 = vmatpush1.msra.mxu0 %v41
  %107 = vmatprep.subr.mxu0 %v44
  %108 = vmatpush1.msra.mxu0 %v43
  %109 = vmatprep.subr.mxu0 %v46
  %110 = vmatpush1.msra.mxu0 %v45
  %111 = vmatprep.subr.mxu0 %v48
  %112 = vmatpush1.msra.mxu0 %v47
  %113 = vmatprep.subr.mxu0 %v50
  %114 = vmatpush1.msra.mxu0 %v49
  %115 = vmatprep.subr.mxu0 %v52
  %116 = vmatpush1.msra.mxu0 %v51
  %117 = vmatprep.subr.mxu0 %v54
  %118 = vmatpush1.msra.mxu0 %v53
  %119 = vmatprep.subr.mxu0 %v56
  %120 = vmatpush1.msra.mxu0 %v55
  %121 = vmatprep.subr.mxu0 %v58
  %122 = vmatpush1.msra.mxu0 %v57
  %123 = vmatprep.subr.mxu0 %v60
  %124 = vmatpush1.msra.mxu0 %v59
  %125 = vmatprep.subr.mxu0 %v62
  %126 = vmatpush1.msra.mxu0 %v61
  %127 = vmatprep.subr.mxu0 %v64
  %128 = vmatpush1.msra.mxu0 %v63
  %129 = vmatprep.subr.mxu0 %v66
  %130 = vmatpush1.msra.mxu0 %v65
  %131 = vmatprep.subr.mxu0 %v68
  %132 = vmatpush1.msra.mxu0 %v67
  %133 = vmatprep.subr.mxu0 %v70
  %134 = vmatpush1.msra.mxu0 %v69
  %135 = vmatprep.subr.mxu0 %v72
  %136 = vmatpush1.msra.mxu0 %v71
  %137 = vmatprep.subr.mxu0 %v74
  %138 = vmatpush1.msra.mxu0 %v73
  %139 = vmatprep.subr.mxu0 %v76
  %140 = vmatpush1.msra.mxu0 %v75
  %141 = vmatprep.subr.mxu0 %v78
  %142 = vmatpush1.msra.mxu0 %v77
  %143 = vmatprep.mubr.f32.mxu0 %v12
  %144 = vmatmul.mubr.f32.gmra.mrb[0].mxu0 %v11
  %v145 = vpop.f32.mrb[0].mxu0
  %v146 = vadd.f32 0.0, %v145
  %v147 = vpop.f32.mrb[0].mxu0
  %v148 = vadd.f32 0.0, %v147
  %149 = vmatprep.mubr.f32.mxu0 %v14
  %150 = vmatmul.mubr.f32.gmra.mrb[0].mxu0 %v13
  %v151 = vpop.f32.mrb[0].mxu0
  %v152 = vadd.f32 0.0, %v151
  %v153 = vpop.f32.mrb[0].mxu0
  %v154 = vadd.f32 0.0, %v153
  %155 = vdwg.mxu0
  %v156 = vmul.f32 %v11, %v146
  %v157 = vmul.f32 %v12, %v148
  %v158 = vmul.f32 %v13, %v152
  %v159 = vmul.f32 %v14, %v154
  %v160 = vadd.f32 %v156, %v158
  %v161 = vadd.f32 %v157, %v159
  %162 = vst [vmem:[%s2] sm:$0xff] %v160
  %163 = vst [vmem:[%s2 + $0x8] sm:$0xff] %v161
  // Predicated region
  $region10: #{loss_fn.1} parent=0 // pred_check
    _
  $region11: #{loss_fn.1} parent=0 // pred_check_branch
    %165 = sbr.rel (0) target = $region13
  $region12: #{loss_fn.1} parent=0 // pred_region
    _
  $region13: #{loss_fn.1} parent=0 // pred_fallthru
    _
  // Predicated region
  $region14: #{loss_fn.1} parent=0 // pred_check
    _
  $region15: #{loss_fn.1} parent=0 // pred_check_branch
    %167 = sbr.rel (0) target = $region17
  $region16: #{loss_fn.1} parent=0 // pred_region
    _
  $region17: #{loss_fn.1} parent=0 // pred_fallthru
    _

</llo_original>
